<compile_context>
chip_gen: v5e
topology: v5e:2x2
jax: 0.10.0
libtpu: 0.0.40
codegen_flags: <defaults>
</compile_context>

<pallas_src>
import functools

import jax
import jax.numpy as jnp
from jax import lax
from jax.experimental import pallas as pl
from jax.experimental.pallas import tpu as pltpu

_LANE = 128


def _triplet_loss_kernel(im_ref, s_ref, dcol_ref, drow_ref, out_ref, *,
                         margin, direction, valid_b, tm, tn, has_pad):
    i = pl.program_id(0)
    j = pl.program_id(1)

    # Per-i partial-sum output block is resident across the whole inner j loop;
    # zero it once per i.  The i axis therefore carries no state -> safe to
    # shard "parallel" across v7x's two TensorCores.
    @pl.when(j == 0)
    def _():
        out_ref[...] = jnp.zeros_like(out_ref)

    # scores[a, b] = <im_row a of block i, s_row b of block j>; contract the
    # LAST dim of both operands (MXU-friendly, no transpose), f32 accumulate.
    scores = lax.dot_general(
        im_ref[...], s_ref[...],
        dimension_numbers=(((1,), (1,)), ((), ())),
        preferred_element_type=jnp.float32)            # (tm, tn) f32

    d_col = dcol_ref[...]                              # (tm, 1): diag of i-block rows
    col0 = pl.multiple_of(j * tn, 128)
    d_row = drow_ref[:, pl.ds(col0, tn)]               # (1, tn): diag of j-block rows
                                                       # (resident, sliced in VMEM)

    m = jnp.float32(margin)
    terms = []
    if direction in ("v2t", "all"):
        terms.append(jnp.maximum(scores - d_col + m, 0.0))   # cost_s  (d1 broadcast)
    if direction in ("t2v", "all"):
        terms.append(jnp.maximum(scores - d_row + m, 0.0))   # cost_im (d2 broadcast)
    contrib = terms[0] if len(terms) == 1 else terms[0] + terms[1]

    # Sublane fold to a (1, tn) partial accumulated into the resident output
    # block: no cross-lane XLU reduce and no SMEM scalar round-trip per tile.
    out_ref[...] += jnp.sum(contrib, axis=0, keepdims=True)

    # Diagonal / padded entries must not contribute; subtract them back out,
    # but only on tiles that can actually contain such entries.
    needs_fix = i == j
    if has_pad:
        needs_fix |= (i == pl.num_programs(0) - 1) | (j == pl.num_programs(1) - 1)

    @pl.when(needs_fix)
    def _():
        row_g = i * tm + lax.broadcasted_iota(jnp.int32, (tm, tn), 0)
        col_g = j * tn + lax.broadcasted_iota(jnp.int32, (tm, tn), 1)
        drop = row_g == col_g
        if has_pad:
            drop |= (row_g >= valid_b) | (col_g >= valid_b)
        out_ref[...] -= jnp.sum(jnp.where(drop, contrib, 0.0),
                                axis=0, keepdims=True)


def _round_up(x, m):
    return -(-x // m) * m


def _vmem_capacity_bytes():
    try:
        return int(pltpu.get_tpu_info().vmem_capacity_bytes)
    except Exception:
        return 64 << 20  # conservative fallback (v7x per-core physical VMEM)


def _tile_vmem_need(tm, tn, bp, d, itemsize):
    return (2 * tm * d * itemsize        # im block (double-buffered)
            + 2 * tn * d * itemsize      # s block (double-buffered)
            + 2 * tm * 4                 # diag column block
            + 2 * bp * 4                 # resident diag row
            + 2 * tn * 4                 # per-i partial-sum output block
            + 4 * tm * tn * 4)           # f32 scores/contrib temporaries (headroom)


def _choose_tiles(bp, d, itemsize, budget):
    # tn at MXU width; grow the resident im block (tm) as far as VMEM allows.
    tn = 256 if bp % 256 == 0 else 128
    for tm in (1024, 512, 256, 128):
        if bp % tm:
            continue
        if _tile_vmem_need(tm, tn, bp, d, itemsize) <= budget:
            return tm, tn
    return 128, tn  # bp is always a multiple of 128


def triplet_loss(s, im, *, margin=0.0, direction="all", cost_style="sum",
                 cast_to_bf16=True, tile_m=None, tile_n=None):
    """Pallas equivalent of TripletLoss.forward(s, im) with the module defaults
    (cosine similarity = raw im @ s.T, max_violation=False). Returns a scalar
    float32. `cast_to_bf16` feeds the MXU bf16 when inputs are f32 (perf)."""
    assert s.shape == im.shape and s.ndim == 2
    assert direction in ("v2t", "t2v", "all")
    assert cost_style in ("sum", "mean")
    B, D = s.shape

    im_k, s_k = im, s
    if cast_to_bf16 and im_k.dtype == jnp.float32:
        im_k = im_k.astype(jnp.bfloat16)
        s_k = s_k.astype(jnp.bfloat16)

    # Prologue: score-matrix diagonal diag[k] = <im_k, s_k>, O(B*D) f32
    # elementwise (cheaper than O(B^2) masked reductions in the kernel).
    diag = jnp.sum(im_k.astype(jnp.float32) * s_k.astype(jnp.float32), axis=1)

    # Pad the batch to a lane-aligned size; padded rows/cols are masked out in
    # the kernel (zero-padding alone is NOT enough when margin > 0).
    Bp = max(_round_up(B, _LANE), _LANE)
    if Bp != B:
        im_k = jnp.pad(im_k, ((0, Bp - B), (0, 0)))
        s_k = jnp.pad(s_k, ((0, Bp - B), (0, 0)))
        diag = jnp.pad(diag, (0, Bp - B))
    diag_col = diag.reshape(Bp, 1)
    diag_row = diag.reshape(1, Bp)

    itemsize = jnp.dtype(im_k.dtype).itemsize
    cap = _vmem_capacity_bytes()
    vmem_limit = max(32 << 20, min(int(cap * 0.7), 100 << 20))
    tm, tn = _choose_tiles(Bp, D, itemsize, int(vmem_limit * 0.75))
    if tile_m is not None:
        tm = tile_m
    if tile_n is not None:
        tn = tile_n
    assert Bp % tm == 0 and Bp % tn == 0
    ni, nj = Bp // tm, Bp // tn

    kernel = functools.partial(
        _triplet_loss_kernel, margin=float(margin), direction=direction,
        valid_b=B, tm=tm, tn=tn, has_pad=(Bp != B))

    n_dirs = 2 if direction == "all" else 1
    cost = pl.CostEstimate(
        flops=int(2 * Bp * Bp * D + 4 * n_dirs * Bp * Bp),
        transcendentals=0,
        bytes_accessed=int((1 + ni) * Bp * D * itemsize   # im once + s restreamed per i
                           + 3 * Bp * 4 + ni * tn * 4))

    out = pl.pallas_call(
        kernel,
        out_shape=jax.ShapeDtypeStruct((ni, 1, tn), jnp.float32),
        grid=(ni, nj),
        in_specs=[
            pl.BlockSpec((tm, D), lambda i, j: (i, 0)),   # im rows, block i (resident over j)
            pl.BlockSpec((tn, D), lambda i, j: (j, 0)),   # s rows, block j (streamed)
            pl.BlockSpec((tm, 1), lambda i, j: (i, 0)),   # diag[i-block] as column
            pl.BlockSpec((1, Bp), lambda i, j: (0, 0)),   # full diag row, resident
        ],
        out_specs=pl.BlockSpec((None, 1, tn), lambda i, j: (i, 0, 0)),
        compiler_params=pltpu.CompilerParams(
            dimension_semantics=("parallel", "arbitrary"),
            vmem_limit_bytes=int(vmem_limit)),
        cost_estimate=cost,
    )(im_k, s_k, diag_col, diag_row)

    total = jnp.sum(out)
    if cost_style == "mean":
        # Each (B,B) cost matrix is divided by B*B (original B, zeroed diag included).
        total = total / jnp.float32(B * B)
    return total


def _triplet_loss_ref(s, im, *, margin=0.0, direction="all", cost_style="sum"):
    """Plain-JAX reference mirroring the PyTorch module (max_violation=False)."""
    scores = jnp.dot(im.astype(jnp.float32), s.astype(jnp.float32).T,
                     precision=lax.Precision.HIGHEST)
    diag = jnp.diag(scores)
    eye = jnp.eye(scores.shape[0], dtype=bool)
    cost_s = jnp.zeros_like(scores)
    cost_im = jnp.zeros_like(scores)
    if direction in ("v2t", "all"):
        cost_s = jnp.where(eye, 0.0, jnp.maximum(margin + scores - diag[:, None], 0.0))
    if direction in ("t2v", "all"):
        cost_im = jnp.where(eye, 0.0, jnp.maximum(margin + scores - diag[None, :], 0.0))
    if cost_style == "sum":
        return cost_s.sum() + cost_im.sum()
    return cost_s.mean() + cost_im.mean()


if __name__ == "__main__":
    key = jax.random.PRNGKey(0)
    k1, k2, k3, k4 = jax.random.split(key, 4)

    # 1) Tiny batch (8 -> padded 128), f32 MXU path, module defaults.
    B, D = 8, 32
    s1 = jax.random.normal(k1, (B, D), dtype=jnp.float32)
    im1 = jax.random.normal(k2, (B, D), dtype=jnp.float32)
    out1 = jax.block_until_ready(triplet_loss(s1, im1, cast_to_bf16=False))
    ref1 = _triplet_loss_ref(s1, im1)
    assert jnp.allclose(out1, ref1, rtol=1e-5, atol=1e-3), (out1, ref1)

    # 2) Multi-tile (2x2) grid, margin > 0, non-divisible batch (200 -> 256
    #    padded), 'mean' cost style; f32 MXU path for a tight check.
    B, D = 200, 64
    s2 = jax.random.normal(k3, (B, D), dtype=jnp.float32)
    im2 = jax.random.normal(k4, (B, D), dtype=jnp.float32)
    out2 = jax.block_until_ready(
        triplet_loss(s2, im2, margin=0.2, cost_style="mean",
                     cast_to_bf16=False, tile_m=128, tile_n=128))
    ref2 = _triplet_loss_ref(s2, im2, margin=0.2, cost_style="mean")
    assert jnp.allclose(out2, ref2, rtol=1e-4, atol=1e-4), (out2, ref2)

    # 3) Default bf16 MXU feed; reference evaluated on the bf16-rounded inputs.
    s3 = s2.astype(jnp.bfloat16).astype(jnp.float32)
    im3 = im2.astype(jnp.bfloat16).astype(jnp.float32)
    out3 = jax.block_until_ready(triplet_loss(s2, im2, margin=0.2))
    ref3 = _triplet_loss_ref(s3, im3, margin=0.2)
    assert jnp.allclose(out3, ref3, rtol=2e-3, atol=2e-2), (out3, ref3)

    print("KERNEL_OK")
</pallas_src>

<mosaic_0001>
module attributes {stable_mosaic.version = 11 : i64} {
  func.func @_triplet_loss_kernel(%arg0: i32, %arg1: i32, %arg2: memref<128x32xf32, #tpu.memory_space<vmem>>, %arg3: memref<128x32xf32, #tpu.memory_space<vmem>>, %arg4: memref<128x1xf32, #tpu.memory_space<vmem>>, %arg5: memref<1x128xf32, #tpu.memory_space<vmem>>, %arg6: memref<1x1x128xf32, #tpu.memory_space<vmem>>) attributes {dimension_semantics = [#tpu.dimension_semantics<parallel>, #tpu.dimension_semantics<arbitrary>], iteration_bounds = array<i64: 1, 1>, scalar_prefetch = 0 : i64, scratch_operands = 0 : i64, tpu.core_type = #tpu.core_type<tc>, window_params = [{transform_indices = @transform_0, window_bounds = array<i64: 128, 32>}, {transform_indices = @transform_1, window_bounds = array<i64: 128, 32>}, {transform_indices = @transform_2, window_bounds = array<i64: 128, 1>}, {pipeline_mode = #tpu.pipeline_mode<synchronous>, transform_indices = @transform_3, window_bounds = array<i64: 1, 128>}, {transform_indices = @transform_4, window_bounds = array<i64: 1, 1, 128>}]} {
    %c0_i32 = arith.constant 0 : i32
    %0 = arith.cmpi eq, %arg1, %c0_i32 : i32
    %1 = arith.extui %0 : i1 to i32
    %c0_i32_0 = arith.constant 0 : i32
    %2 = arith.cmpi ne, %1, %c0_i32_0 : i32
    scf.if %2 {
      %cst_21 = arith.constant 0.000000e+00 : f32
      %39 = vector.broadcast %cst_21 : f32 to vector<1x128xf32>
      %c0_22 = arith.constant 0 : index
      %c0_23 = arith.constant 0 : index
      %c0_24 = arith.constant 0 : index
      %40 = vector.load %arg6[%c0_22, %c0_23, %c0_24] : memref<1x1x128xf32, #tpu.memory_space<vmem>>, vector<1x1x128xf32>
      %41 = vector.shape_cast %40 : vector<1x1x128xf32> to vector<1x128xf32>
      %42 = vector.shape_cast %39 : vector<1x128xf32> to vector<1x1x128xf32>
      tpu.vector_store %arg6[%c0_22, %c0_23, %c0_24], %42 {strides = array<i32>} : memref<1x1x128xf32, #tpu.memory_space<vmem>>, vector<1x1x128xf32>,
    } else {
    }
    %c0 = arith.constant 0 : index
    %c0_1 = arith.constant 0 : index
    %3 = vector.load %arg2[%c0, %c0_1] : memref<128x32xf32, #tpu.memory_space<vmem>>, vector<128x32xf32>
    %c0_2 = arith.constant 0 : index
    %c0_3 = arith.constant 0 : index
    %4 = vector.load %arg3[%c0_2, %c0_3] : memref<128x32xf32, #tpu.memory_space<vmem>>, vector<128x32xf32>
    %cst = arith.constant dense<0.000000e+00> : vector<128x128xf32>
    %5 = tpu.matmul %3, %4, %cst {dimension_numbers = #tpu.dot_dimension_numbers<[1], [1], [0], [0], [0, 0, 1, 0], [], []>} : vector<128x32xf32>, vector<128x32xf32>, vector<128x128xf32> -> vector<128x128xf32>
    %c0_4 = arith.constant 0 : index
    %c0_5 = arith.constant 0 : index
    %6 = vector.load %arg4[%c0_4, %c0_5] : memref<128x1xf32, #tpu.memory_space<vmem>>, vector<128x1xf32>
    %c128_i32 = arith.constant 128 : i32
    %7 = arith.muli %arg1, %c128_i32 : i32
    %8 = tpu.assume_multiple %7, 128 : i32
    %c0_6 = arith.constant 0 : index
    %9 = arith.index_cast %8 : i32 to index
    %10 = vector.load %arg5[%c0_6, %9] : memref<1x128xf32, #tpu.memory_space<vmem>>, vector<1x128xf32>
    %11 = vector.broadcast %6 : vector<128x1xf32> to vector<128x128xf32>
    %12 = arith.subf %5, %11 : vector<128x128xf32>
    %cst_7 = arith.constant 0.000000e+00 : f32
    %13 = vector.broadcast %cst_7 : f32 to vector<128x128xf32>
    %14 = arith.addf %12, %13 : vector<128x128xf32>
    %cst_8 = arith.constant 0.000000e+00 : f32
    %15 = vector.broadcast %cst_8 : f32 to vector<128x128xf32>
    %16 = arith.maximumf %14, %15 : vector<128x128xf32>
    %17 = vector.broadcast %10 : vector<1x128xf32> to vector<128x128xf32>
    %18 = arith.subf %5, %17 : vector<128x128xf32>
    %cst_9 = arith.constant 0.000000e+00 : f32
    %19 = vector.broadcast %cst_9 : f32 to vector<128x128xf32>
    %20 = arith.addf %18, %19 : vector<128x128xf32>
    %cst_10 = arith.constant 0.000000e+00 : f32
    %21 = vector.broadcast %cst_10 : f32 to vector<128x128xf32>
    %22 = arith.maximumf %20, %21 : vector<128x128xf32>
    %23 = arith.addf %16, %22 : vector<128x128xf32>
    %c0_11 = arith.constant 0 : index
    %c0_12 = arith.constant 0 : index
    %c0_13 = arith.constant 0 : index
    %24 = vector.load %arg6[%c0_11, %c0_12, %c0_13] : memref<1x1x128xf32, #tpu.memory_space<vmem>>, vector<1x1x128xf32>
    %25 = vector.shape_cast %24 : vector<1x1x128xf32> to vector<1x128xf32>
    %cst_14 = arith.constant dense<0.000000e+00> : vector<128xf32>
    %26 = vector.multi_reduction <add>, %23, %cst_14 [0] : vector<128x128xf32> to vector<128xf32>
    %27 = vector.shape_cast %26 : vector<128xf32> to vector<1x128xf32>
    %28 = arith.addf %25, %27 : vector<1x128xf32>
    %c0_15 = arith.constant 0 : index
    %c0_16 = arith.constant 0 : index
    %c0_17 = arith.constant 0 : index
    %29 = vector.load %arg6[%c0_15, %c0_16, %c0_17] : memref<1x1x128xf32, #tpu.memory_space<vmem>>, vector<1x1x128xf32>
    %30 = vector.shape_cast %29 : vector<1x1x128xf32> to vector<1x128xf32>
    %31 = vector.shape_cast %28 : vector<1x128xf32> to vector<1x1x128xf32>
    tpu.vector_store %arg6[%c0_15, %c0_16, %c0_17], %31 {strides = array<i32>} : memref<1x1x128xf32, #tpu.memory_space<vmem>>, vector<1x1x128xf32>,
    %32 = arith.cmpi eq, %arg0, %arg1 : i32
    %c0_i32_18 = arith.constant 0 : i32
    %33 = arith.cmpi eq, %arg0, %c0_i32_18 : i32
    %c0_i32_19 = arith.constant 0 : i32
    %34 = arith.cmpi eq, %arg1, %c0_i32_19 : i32
    %35 = arith.ori %33, %34 : i1
    %36 = arith.ori %32, %35 : i1
    %37 = arith.extui %36 : i1 to i32
    %c0_i32_20 = arith.constant 0 : i32
    %38 = arith.cmpi ne, %37, %c0_i32_20 : i32
    scf.if %38 {
      %c128_i32_21 = arith.constant 128 : i32
      %39 = arith.muli %arg0, %c128_i32_21 : i32
      %40 = tpu.iota {dimensions = array<i32: 0>} : vector<128x128xi32>
      %41 = vector.broadcast %39 : i32 to vector<128x128xi32>
      %42 = arith.addi %41, %40 : vector<128x128xi32>
      %c128_i32_22 = arith.constant 128 : i32
      %43 = arith.muli %arg1, %c128_i32_22 : i32
      %44 = tpu.iota {dimensions = array<i32: 1>} : vector<128x128xi32>
      %45 = vector.broadcast %43 : i32 to vector<128x128xi32>
      %46 = arith.addi %45, %44 : vector<128x128xi32>
      %47 = arith.cmpi eq, %42, %46 : vector<128x128xi32>
      %c8_i32 = arith.constant 8 : i32
      %48 = vector.broadcast %c8_i32 : i32 to vector<128x128xi32>
      %49 = arith.cmpi sge, %42, %48 : vector<128x128xi32>
      %c8_i32_23 = arith.constant 8 : i32
      %50 = vector.broadcast %c8_i32_23 : i32 to vector<128x128xi32>
      %51 = arith.cmpi sge, %46, %50 : vector<128x128xi32>
      %52 = arith.ori %49, %51 : vector<128x128xi1>
      %53 = arith.ori %47, %52 : vector<128x128xi1>
      %c0_24 = arith.constant 0 : index
      %c0_25 = arith.constant 0 : index
      %c0_26 = arith.constant 0 : index
      %54 = vector.load %arg6[%c0_24, %c0_25, %c0_26] : memref<1x1x128xf32, #tpu.memory_space<vmem>>, vector<1x1x128xf32>
      %55 = vector.shape_cast %54 : vector<1x1x128xf32> to vector<1x128xf32>
      %cst_27 = arith.constant 0.000000e+00 : f32
      %56 = vector.broadcast %cst_27 : f32 to vector<128x128xf32>
      %57 = arith.select %53, %23, %56 : vector<128x128xi1>, vector<128x128xf32>
      %cst_28 = arith.constant dense<0.000000e+00> : vector<128xf32>
      %58 = vector.multi_reduction <add>, %57, %cst_28 [0] : vector<128x128xf32> to vector<128xf32>
      %59 = vector.shape_cast %58 : vector<128xf32> to vector<1x128xf32>
      %60 = arith.subf %55, %59 : vector<1x128xf32>
      %c0_29 = arith.constant 0 : index
      %c0_30 = arith.constant 0 : index
      %c0_31 = arith.constant 0 : index
      %61 = vector.load %arg6[%c0_29, %c0_30, %c0_31] : memref<1x1x128xf32, #tpu.memory_space<vmem>>, vector<1x1x128xf32>
      %62 = vector.shape_cast %61 : vector<1x1x128xf32> to vector<1x128xf32>
      %63 = vector.shape_cast %60 : vector<1x128xf32> to vector<1x1x128xf32>
      tpu.vector_store %arg6[%c0_29, %c0_30, %c0_31], %63 {strides = array<i32>} : memref<1x1x128xf32, #tpu.memory_space<vmem>>, vector<1x1x128xf32>,
    } else {
    }
    return
  }
  func.func @transform_0(%arg0: i32, %arg1: i32) -> (i32, i32) {
    %c0_i32 = arith.constant 0 : i32
    %c0_i32_0 = arith.constant 0 : i32
    return %arg0, %c0_i32 : i32, i32
  }
  func.func @transform_1(%arg0: i32, %arg1: i32) -> (i32, i32) {
    %c0_i32 = arith.constant 0 : i32
    %c0_i32_0 = arith.constant 0 : i32
    return %arg1, %c0_i32 : i32, i32
  }
  func.func @transform_2(%arg0: i32, %arg1: i32) -> (i32, i32) {
    %c0_i32 = arith.constant 0 : i32
    %c0_i32_0 = arith.constant 0 : i32
    return %arg0, %c0_i32 : i32, i32
  }
  func.func @transform_3(%arg0: i32, %arg1: i32) -> (i32, i32) {
    %c0_i32 = arith.constant 0 : i32
    %c0_i32_0 = arith.constant 0 : i32
    %c0_i32_1 = arith.constant 0 : i32
    return %c0_i32, %c0_i32_0 : i32, i32
  }
  func.func @transform_4(%arg0: i32, %arg1: i32) -> (i32, i32, i32) {
    %c0_i32 = arith.constant 0 : i32
    %c0_i32_0 = arith.constant 0 : i32
    %c0_i32_1 = arith.constant 0 : i32
    return %arg0, %c0_i32, %c0_i32_0 : i32, i32, i32
  }
}

</mosaic_0001>

<llo_original>
// kernel: tpu_custom_call.1
$region0: #{tpu_custom_call.1}
  #allocation0 [shape = 'u32[]', space=smem, size = 0x4, offset = 0x4, fixed_abs, tag = 'smem constant byte address 0x4 - core index']
  #allocation1 [shape = 'u32[72,128]{1,0:T(1,128)}', space=vmem, size = 0x9000, scoped, tag = 'internal scratch']
  %s0 = inlined_call_operand.vmem [shape: f32[128,32], index: 0, kind: input, shape index: {}]
  %s1 = inlined_call_operand.vmem [shape: f32[128,32], index: 1, kind: input, shape index: {}]
  %s2 = inlined_call_operand.vmem [shape: f32[128,1], index: 2, kind: input, shape index: {}]
  %s3 = inlined_call_operand.vmem [shape: f32[1,128], index: 3, kind: input, shape index: {}]
  %s4 = inlined_call_operand.hbm [shape: f32[1,1,128], index: 4, kind: output, shape index: {}]
  %s5 = sld [smem:[#allocation0]]
  $region34: #{tpu_custom_call.1} parent=0
    _
  %s7 = ssub.s32 1, %s5
  %s8 = scalar_select 0, %s7, %s5
  $region1: #{tpu_custom_call.1} parent=0
    #allocation2 [shape = 'u8[512]{0}', space=vmem, size = 0x400, scoped, tag = 'output window, operand 0, single buffered']
    #allocation3 [shape = 's32[1]{0}', space=sflag, size = 0x4, scoped, tag = 'scoped memory for tpu_custom_call.1']
    %9 = vsyncpa [#allocation3], 0
    // Predicated region
    $region2: #{tpu_custom_call.1} parent=1 // pred_check
      _
    $region3: #{tpu_custom_call.1} parent=1 // pred_check_branch
      %11 = sbr.rel (0) target = $region5
    $region4: #{tpu_custom_call.1} parent=1 // pred_region
      _
    $region5: #{tpu_custom_call.1} parent=1 // pred_fallthru
      _
    // Predicated region
    $region6: #{tpu_custom_call.1} parent=1 // pred_check
      _
    $region7: #{tpu_custom_call.1} parent=1 // pred_check_branch
      %13 = sbr.rel (0) target = $region9
    $region8: #{tpu_custom_call.1} parent=1 // pred_region
      _
    $region9: #{tpu_custom_call.1} parent=1 // pred_fallthru
      _
    // Predicated region
    $region10: #{tpu_custom_call.1} parent=1 // pred_check
      _
    $region11: #{tpu_custom_call.1} parent=1 // pred_check_branch
      %15 = sbr.rel (0) target = $region13
    $region12: #{tpu_custom_call.1} parent=1 // pred_region
      _
    $region13: #{tpu_custom_call.1} parent=1 // pred_fallthru
      _
    // Predicated region
    $region14: #{tpu_custom_call.1} parent=1 // pred_check
      _
    $region15: #{tpu_custom_call.1} parent=1 // pred_check_branch
      %17 = sbr.rel (0) target = $region17
    $region16: #{tpu_custom_call.1} parent=1 // pred_region
      _
    $region17: #{tpu_custom_call.1} parent=1 // pred_fallthru
      _
    %p18 = scmp.eq.s32.totalorder 0, 0
    // Predicated region
    $region18: #{tpu_custom_call.1} parent=1 // pred_check
      %p19 = pneg %p18
    $region19: #{tpu_custom_call.1} parent=1 // pred_check_branch
      %21 = sbr.rel (%p19) target = $region21
    $region20: #{tpu_custom_call.1} parent=1 // pred_region
      %22 = vst [vmem:[#allocation2] sm:$0x1] 0.0
    $region21: #{tpu_custom_call.1} parent=1 // pred_fallthru
      _
    %v23 = vld [vmem:[%s0] sm:$0xff]
    %v24 = vld [vmem:[%s0 + $0x8] sm:$0xff]
    %v25 = vld [vmem:[%s0 + $0x10] sm:$0xff]
    %v26 = vld [vmem:[%s0 + $0x18] sm:$0xff]
    %v27 = vld [vmem:[%s0 + $0x20] sm:$0xff]
    %v28 = vld [vmem:[%s0 + $0x28] sm:$0xff]
    %v29 = vld [vmem:[%s0 + $0x30] sm:$0xff]
    %v30 = vld [vmem:[%s0 + $0x38] sm:$0xff]
    %v31 = vld [vmem:[%s0 + $0x40] sm:$0xff]
    %v32 = vld [vmem:[%s0 + $0x48] sm:$0xff]
    %v33 = vld [vmem:[%s0 + $0x50] sm:$0xff]
    %v34 = vld [vmem:[%s0 + $0x58] sm:$0xff]
    %v35 = vld [vmem:[%s0 + $0x60] sm:$0xff]
    %v36 = vld [vmem:[%s0 + $0x68] sm:$0xff]
    %v37 = vld [vmem:[%s0 + $0x70] sm:$0xff]
    %v38 = vld [vmem:[%s0 + $0x78] sm:$0xff]
    %v39 = vld [vmem:[%s1] sm:$0xff]
    %v40 = vld [vmem:[%s1 + $0x8] sm:$0xff]
    %v41 = vld [vmem:[%s1 + $0x10] sm:$0xff]
    %v42 = vld [vmem:[%s1 + $0x18] sm:$0xff]
    %v43 = vld [vmem:[%s1 + $0x20] sm:$0xff]
    %v44 = vld [vmem:[%s1 + $0x28] sm:$0xff]
    %v45 = vld [vmem:[%s1 + $0x30] sm:$0xff]
    %v46 = vld [vmem:[%s1 + $0x38] sm:$0xff]
    %v47 = vld [vmem:[%s1 + $0x40] sm:$0xff]
    %v48 = vld [vmem:[%s1 + $0x48] sm:$0xff]
    %v49 = vld [vmem:[%s1 + $0x50] sm:$0xff]
    %v50 = vld [vmem:[%s1 + $0x58] sm:$0xff]
    %v51 = vld [vmem:[%s1 + $0x60] sm:$0xff]
    %v52 = vld [vmem:[%s1 + $0x68] sm:$0xff]
    %v53 = vld [vmem:[%s1 + $0x70] sm:$0xff]
    %v54 = vld [vmem:[%s1 + $0x78] sm:$0xff]
    %vm55 = vcmask 261120
    %v57 = vsel %vm55, %v23, 0
    %v60 = vsel %vm55, %v24, 0
    %v63 = vsel %vm55, %v25, 0
    %v66 = vsel %vm55, %v26, 0
    %v69 = vsel %vm55, %v27, 0
    %v72 = vsel %vm55, %v28, 0
    %v75 = vsel %vm55, %v29, 0
    %v78 = vsel %vm55, %v30, 0
    %v81 = vsel %vm55, %v31, 0
    %v84 = vsel %vm55, %v32, 0
    %v87 = vsel %vm55, %v33, 0
    %v90 = vsel %vm55, %v34, 0
    %v93 = vsel %vm55, %v35, 0
    %v96 = vsel %vm55, %v36, 0
    %v99 = vsel %vm55, %v37, 0
    %v102 = vsel %vm55, %v38, 0
    %v105 = vsel %vm55, %v39, 0
    %v108 = vsel %vm55, %v40, 0
    %v111 = vsel %vm55, %v41, 0
    %v114 = vsel %vm55, %v42, 0
    %v117 = vsel %vm55, %v43, 0
    %v120 = vsel %vm55, %v44, 0
    %v123 = vsel %vm55, %v45, 0
    %v126 = vsel %vm55, %v46, 0
    %v129 = vsel %vm55, %v47, 0
    %v132 = vsel %vm55, %v48, 0
    %v135 = vsel %vm55, %v49, 0
    %v138 = vsel %vm55, %v50, 0
    %v141 = vsel %vm55, %v51, 0
    %v144 = vsel %vm55, %v52, 0
    %v147 = vsel %vm55, %v53, 0
    %v150 = vsel %vm55, %v54, 0
    %152 = vmatpush.xpose.msra.mxu0 %v150
    %153 = vmatpush.xpose.msra.mxu0 %v147
    %154 = vmatpush.xpose.msra.mxu0 %v144
    %155 = vmatpush.xpose.msra.mxu0 %v141
    %156 = vmatpush.xpose.msra.mxu0 %v138
    %157 = vmatpush.xpose.msra.mxu0 %v135
    %158 = vmatpush.xpose.msra.mxu0 %v132
    %159 = vmatpush.xpose.msra.mxu0 %v129
    %160 = vmatpush.xpose.msra.mxu0 %v126
    %161 = vmatpush.xpose.msra.mxu0 %v123
    %162 = vmatpush.xpose.msra.mxu0 %v120
    %163 = vmatpush.xpose.msra.mxu0 %v117
    %164 = vmatpush.xpose.msra.mxu0 %v114
    %165 = vmatpush.xpose.msra.mxu0 %v111
    %166 = vmatpush.xpose.msra.mxu0 %v108
    %167 = vmatpush.xpose.msra.mxu0 %v105
    %168 = vmatmul.f32.gmra.mxu0 %v57
    %v169 = vpop.f32.mrf.mxu0
    %v170 = vadd.f32 0.0, %v169
    %171 = vmatmul.f32.gmra.mxu0 %v60
    %v172 = vpop.f32.mrf.mxu0
    %v173 = vadd.f32 0.0, %v172
    %174 = vmatmul.f32.gmra.mxu0 %v63
    %v175 = vpop.f32.mrf.mxu0
    %v176 = vadd.f32 0.0, %v175
    %177 = vmatmul.f32.gmra.mxu0 %v66
    %v178 = vpop.f32.mrf.mxu0
    %v179 = vadd.f32 0.0, %v178
    %180 = vmatmul.f32.gmra.mxu0 %v69
    %v181 = vpop.f32.mrf.mxu0
    %v182 = vadd.f32 0.0, %v181
    %183 = vmatmul.f32.gmra.mxu0 %v72
    %v184 = vpop.f32.mrf.mxu0
    %v185 = vadd.f32 0.0, %v184
    %186 = vmatmul.f32.gmra.mxu0 %v75
    %v187 = vpop.f32.mrf.mxu0
    %v188 = vadd.f32 0.0, %v187
    %189 = vmatmul.f32.gmra.mxu0 %v78
    %v190 = vpop.f32.mrf.mxu0
    %v191 = vadd.f32 0.0, %v190
    %192 = vmatmul.f32.gmra.mxu0 %v81
    %v193 = vpop.f32.mrf.mxu0
    %v194 = vadd.f32 0.0, %v193
    %195 = vmatmul.f32.gmra.mxu0 %v84
    %v196 = vpop.f32.mrf.mxu0
    %v197 = vadd.f32 0.0, %v196
    %198 = vmatmul.f32.gmra.mxu0 %v87
    %v199 = vpop.f32.mrf.mxu0
    %v200 = vadd.f32 0.0, %v199
    %201 = vmatmul.f32.gmra.mxu0 %v90
    %v202 = vpop.f32.mrf.mxu0
    %v203 = vadd.f32 0.0, %v202
    %204 = vmatmul.f32.gmra.mxu0 %v93
    %v205 = vpop.f32.mrf.mxu0
    %v206 = vadd.f32 0.0, %v205
    %207 = vmatmul.f32.gmra.mxu0 %v96
    %v208 = vpop.f32.mrf.mxu0
    %v209 = vadd.f32 0.0, %v208
    %210 = vmatmul.f32.gmra.mxu0 %v99
    %v211 = vpop.f32.mrf.mxu0
    %v212 = vadd.f32 0.0, %v211
    %213 = vmatmul.f32.gmra.mxu0 %v102
    %v214 = vpop.f32.mrf.mxu0
    %v215 = vadd.f32 0.0, %v214
    %216 = vdwg.mxu0
    %v217 = vld [vmem:[%s2] sm:$0xff]
    %v218 = vld [vmem:[%s2 + $0x8] sm:$0xff]
    %v219 = vld [vmem:[%s2 + $0x10] sm:$0xff]
    %v220 = vld [vmem:[%s2 + $0x18] sm:$0xff]
    %v221 = vld [vmem:[%s2 + $0x20] sm:$0xff]
    %v222 = vld [vmem:[%s2 + $0x28] sm:$0xff]
    %v223 = vld [vmem:[%s2 + $0x30] sm:$0xff]
    %v224 = vld [vmem:[%s2 + $0x38] sm:$0xff]
    %v225 = vld [vmem:[%s2 + $0x40] sm:$0xff]
    %v226 = vld [vmem:[%s2 + $0x48] sm:$0xff]
    %v227 = vld [vmem:[%s2 + $0x50] sm:$0xff]
    %v228 = vld [vmem:[%s2 + $0x58] sm:$0xff]
    %v229 = vld [vmem:[%s2 + $0x60] sm:$0xff]
    %v230 = vld [vmem:[%s2 + $0x68] sm:$0xff]
    %v231 = vld [vmem:[%s2 + $0x70] sm:$0xff]
    %v232 = vld [vmem:[%s2 + $0x78] sm:$0xff]
    %s233 = smul.u32 0, 128
    %s234 = sshra.s32 %s233, 7
    %s235 = sand.u32 %s233, 127
    %s236 = scalar_lea.vmem %s3, %s234
    %v237 = vld [vmem:[%s236] sm:$0x1]
    %239 = vset.pattern.permute.xlu0 0
    %240 = vperm.xlu0 %239, %v217
    %v241 = vpop.permute.xlu0 %240
    %244 = vset.pattern.permute.xlu0 0
    %245 = vperm.xlu0 %244, %v218
    %v246 = vpop.permute.xlu0 %245
    %249 = vset.pattern.permute.xlu0 0
    %250 = vperm.xlu0 %249, %v219
    %v251 = vpop.permute.xlu0 %250
    %254 = vset.pattern.permute.xlu0 0
    %255 = vperm.xlu0 %254, %v220
    %v256 = vpop.permute.xlu0 %255
    %259 = vset.pattern.permute.xlu0 0
    %260 = vperm.xlu0 %259, %v221
    %v261 = vpop.permute.xlu0 %260
    %264 = vset.pattern.permute.xlu0 0
    %265 = vperm.xlu0 %264, %v222
    %v266 = vpop.permute.xlu0 %265
    %269 = vset.pattern.permute.xlu0 0
    %270 = vperm.xlu0 %269, %v223
    %v271 = vpop.permute.xlu0 %270
    %274 = vset.pattern.permute.xlu0 0
    %275 = vperm.xlu0 %274, %v224
    %v276 = vpop.permute.xlu0 %275
    %279 = vset.pattern.permute.xlu0 0
    %280 = vperm.xlu0 %279, %v225
    %v281 = vpop.permute.xlu0 %280
    %284 = vset.pattern.permute.xlu0 0
    %285 = vperm.xlu0 %284, %v226
    %v286 = vpop.permute.xlu0 %285
    %289 = vset.pattern.permute.xlu0 0
    %290 = vperm.xlu0 %289, %v227
    %v291 = vpop.permute.xlu0 %290
    %294 = vset.pattern.permute.xlu0 0
    %295 = vperm.xlu0 %294, %v228
    %v296 = vpop.permute.xlu0 %295
    %299 = vset.pattern.permute.xlu0 0
    %300 = vperm.xlu0 %299, %v229
    %v301 = vpop.permute.xlu0 %300
    %304 = vset.pattern.permute.xlu0 0
    %305 = vperm.xlu0 %304, %v230
    %v306 = vpop.permute.xlu0 %305
    %309 = vset.pattern.permute.xlu0 0
    %310 = vperm.xlu0 %309, %v231
    %v311 = vpop.permute.xlu0 %310
    %314 = vset.pattern.permute.xlu0 0
    %315 = vperm.xlu0 %314, %v232
    %v316 = vpop.permute.xlu0 %315
    %v318 = vsub.f32 %v170, %v241
    %v319 = vsub.f32 %v173, %v246
    %v320 = vsub.f32 %v176, %v251
    %v321 = vsub.f32 %v179, %v256
    %v322 = vsub.f32 %v182, %v261
    %v323 = vsub.f32 %v185, %v266
    %v324 = vsub.f32 %v188, %v271
    %v325 = vsub.f32 %v191, %v276
    %v326 = vsub.f32 %v194, %v281
    %v327 = vsub.f32 %v197, %v286
    %v328 = vsub.f32 %v200, %v291
    %v329 = vsub.f32 %v203, %v296
    %v330 = vsub.f32 %v206, %v301
    %v331 = vsub.f32 %v209, %v306
    %v332 = vsub.f32 %v212, %v311
    %v333 = vsub.f32 %v215, %v316
    %v334 = vadd.f32 %v318, 0.0
    %v335 = vadd.f32 %v319, 0.0
    %v336 = vadd.f32 %v320, 0.0
    %v337 = vadd.f32 %v321, 0.0
    %v338 = vadd.f32 %v322, 0.0
    %v339 = vadd.f32 %v323, 0.0
    %v340 = vadd.f32 %v324, 0.0
    %v341 = vadd.f32 %v325, 0.0
    %v342 = vadd.f32 %v326, 0.0
    %v343 = vadd.f32 %v327, 0.0
    %v344 = vadd.f32 %v328, 0.0
    %v345 = vadd.f32 %v329, 0.0
    %v346 = vadd.f32 %v330, 0.0
    %v347 = vadd.f32 %v331, 0.0
    %v348 = vadd.f32 %v332, 0.0
    %v349 = vadd.f32 %v333, 0.0
    %v350 = vmax.f32 %v334, 0.0
    %v351 = vmax.f32 %v335, 0.0
    %v352 = vmax.f32 %v336, 0.0
    %v353 = vmax.f32 %v337, 0.0
    %v354 = vmax.f32 %v338, 0.0
    %v355 = vmax.f32 %v339, 0.0
    %v356 = vmax.f32 %v340, 0.0
    %v357 = vmax.f32 %v341, 0.0
    %v358 = vmax.f32 %v342, 0.0
    %v359 = vmax.f32 %v343, 0.0
    %v360 = vmax.f32 %v344, 0.0
    %v361 = vmax.f32 %v345, 0.0
    %v362 = vmax.f32 %v346, 0.0
    %v363 = vmax.f32 %v347, 0.0
    %v364 = vmax.f32 %v348, 0.0
    %v365 = vmax.f32 %v349, 0.0
    %v367 = vperm.slane %v237, 0
    %v369 = vsub.f32 %v170, %v367
    %v370 = vsub.f32 %v173, %v367
    %v371 = vsub.f32 %v176, %v367
    %v372 = vsub.f32 %v179, %v367
    %v373 = vsub.f32 %v182, %v367
    %v374 = vsub.f32 %v185, %v367
    %v375 = vsub.f32 %v188, %v367
    %v376 = vsub.f32 %v191, %v367
    %v377 = vsub.f32 %v194, %v367
    %v378 = vsub.f32 %v197, %v367
    %v379 = vsub.f32 %v200, %v367
    %v380 = vsub.f32 %v203, %v367
    %v381 = vsub.f32 %v206, %v367
    %v382 = vsub.f32 %v209, %v367
    %v383 = vsub.f32 %v212, %v367
    %v384 = vsub.f32 %v215, %v367
    %v385 = vadd.f32 %v369, 0.0
    %v386 = vadd.f32 %v370, 0.0
    %v387 = vadd.f32 %v371, 0.0
    %v388 = vadd.f32 %v372, 0.0
    %v389 = vadd.f32 %v373, 0.0
    %v390 = vadd.f32 %v374, 0.0
    %v391 = vadd.f32 %v375, 0.0
    %v392 = vadd.f32 %v376, 0.0
    %v393 = vadd.f32 %v377, 0.0
    %v394 = vadd.f32 %v378, 0.0
    %v395 = vadd.f32 %v379, 0.0
    %v396 = vadd.f32 %v380, 0.0
    %v397 = vadd.f32 %v381, 0.0
    %v398 = vadd.f32 %v382, 0.0
    %v399 = vadd.f32 %v383, 0.0
    %v400 = vadd.f32 %v384, 0.0
    %v401 = vmax.f32 %v385, 0.0
    %v402 = vmax.f32 %v386, 0.0
    %v403 = vmax.f32 %v387, 0.0
    %v404 = vmax.f32 %v388, 0.0
    %v405 = vmax.f32 %v389, 0.0
    %v406 = vmax.f32 %v390, 0.0
    %v407 = vmax.f32 %v391, 0.0
    %v408 = vmax.f32 %v392, 0.0
    %v409 = vmax.f32 %v393, 0.0
    %v410 = vmax.f32 %v394, 0.0
    %v411 = vmax.f32 %v395, 0.0
    %v412 = vmax.f32 %v396, 0.0
    %v413 = vmax.f32 %v397, 0.0
    %v414 = vmax.f32 %v398, 0.0
    %v415 = vmax.f32 %v399, 0.0
    %v416 = vmax.f32 %v400, 0.0
    %v417 = vadd.f32 %v350, %v401
    %v418 = vadd.f32 %v351, %v402
    %v419 = vadd.f32 %v352, %v403
    %v420 = vadd.f32 %v353, %v404
    %v421 = vadd.f32 %v354, %v405
    %v422 = vadd.f32 %v355, %v406
    %v423 = vadd.f32 %v356, %v407
    %v424 = vadd.f32 %v357, %v408
    %v425 = vadd.f32 %v358, %v409
    %v426 = vadd.f32 %v359, %v410
    %v427 = vadd.f32 %v360, %v411
    %v428 = vadd.f32 %v361, %v412
    %v429 = vadd.f32 %v362, %v413
    %v430 = vadd.f32 %v363, %v414
    %v431 = vadd.f32 %v364, %v415
    %v432 = vadd.f32 %v365, %v416
    %v433 = vld [vmem:[#allocation2] sm:$0x1]
    %v434 = vadd.f32 %v417, %v418
    %v435 = vadd.f32 %v434, %v419
    %v436 = vadd.f32 %v435, %v420
    %v437 = vadd.f32 %v436, %v421
    %v438 = vadd.f32 %v437, %v422
    %v439 = vadd.f32 %v438, %v423
    %v440 = vadd.f32 %v439, %v424
    %v441 = vadd.f32 %v440, %v425
    %v442 = vadd.f32 %v441, %v426
    %v443 = vadd.f32 %v442, %v427
    %v444 = vadd.f32 %v443, %v428
    %v445 = vadd.f32 %v444, %v429
    %v446 = vadd.f32 %v445, %v430
    %v447 = vadd.f32 %v446, %v431
    %v448 = vadd.f32 %v447, %v432
    %v449 = vrot.slane %v448, 4
    %v450 = vadd.f32 %v448, %v449
    %v451 = vrot.slane %v450, 2
    %v452 = vadd.f32 %v450, %v451
    %v453 = vrot.slane %v452, 1
    %v454 = vadd.f32 %v452, %v453
    %v455 = vadd.f32 %v433, %v454
    %456 = vst [vmem:[#allocation2] sm:$0x1] %v455
    %p457 = scmp.eq.s32.totalorder 0, 0
    %p458 = scmp.eq.s32.totalorder 0, 0
    %p459 = por %p458, %p18
    %p460 = por %p457, %p459
    // Predicated region
    $region22: #{tpu_custom_call.1} parent=1 // pred_check
      %p461 = pneg %p460
    $region23: #{tpu_custom_call.1} parent=1 // pred_check_branch
      %463 = sbr.rel (%p461) target = $region25
    $region24: #{tpu_custom_call.1} parent=1 // pred_region
      %s464 = smul.u32 0, 128
      %v465 = vlaneseq
      %v466 = vshrl.u32 %v465, 7
      %v467 = vadd.s32 %v466, 8
      %v468 = vadd.s32 %v466, 16
      %v469 = vadd.s32 %v466, 24
      %v470 = vadd.s32 %v466, 32
      %v471 = vadd.s32 %v466, 40
      %v472 = vadd.s32 %v466, 48
      %v473 = vadd.s32 %v466, 56
      %v474 = vadd.s32 %v466, 64
      %v475 = vadd.s32 %v466, 72
      %v476 = vadd.s32 %v466, 80
      %v477 = vadd.s32 %v466, 88
      %v478 = vadd.s32 %v466, 96
      %v479 = vadd.s32 %v466, 104
      %v480 = vadd.s32 %v466, 112
      %v481 = vadd.s32 %v466, 120
      %v482 = vstv %s464
      %v483 = vadd.s32 %v482, %v466
      %v484 = vadd.s32 %v482, %v467
      %v485 = vadd.s32 %v482, %v468
      %v486 = vadd.s32 %v482, %v469
      %v487 = vadd.s32 %v482, %v470
      %v488 = vadd.s32 %v482, %v471
      %v489 = vadd.s32 %v482, %v472
      %v490 = vadd.s32 %v482, %v473
      %v491 = vadd.s32 %v482, %v474
      %v492 = vadd.s32 %v482, %v475
      %v493 = vadd.s32 %v482, %v476
      %v494 = vadd.s32 %v482, %v477
      %v495 = vadd.s32 %v482, %v478
      %v496 = vadd.s32 %v482, %v479
      %v497 = vadd.s32 %v482, %v480
      %v498 = vadd.s32 %v482, %v481
      %v499 = vlaneseq
      %v500 = vand.u32 %v499, 127
      %v501 = vstv %s233
      %v502 = vadd.s32 %v501, %v500
      %vm503 = vcmp.eq.s32.totalorder %v483, %v502
      %vm504 = vcmp.eq.s32.totalorder %v484, %v502
      %vm505 = vcmp.eq.s32.totalorder %v485, %v502
      %vm506 = vcmp.eq.s32.totalorder %v486, %v502
      %vm507 = vcmp.eq.s32.totalorder %v487, %v502
      %vm508 = vcmp.eq.s32.totalorder %v488, %v502
      %vm509 = vcmp.eq.s32.totalorder %v489, %v502
      %vm510 = vcmp.eq.s32.totalorder %v490, %v502
      %vm511 = vcmp.eq.s32.totalorder %v491, %v502
      %vm512 = vcmp.eq.s32.totalorder %v492, %v502
      %vm513 = vcmp.eq.s32.totalorder %v493, %v502
      %vm514 = vcmp.eq.s32.totalorder %v494, %v502
      %vm515 = vcmp.eq.s32.totalorder %v495, %v502
      %vm516 = vcmp.eq.s32.totalorder %v496, %v502
      %vm517 = vcmp.eq.s32.totalorder %v497, %v502
      %vm518 = vcmp.eq.s32.totalorder %v498, %v502
      %vm519 = vcmp.ge.s32.totalorder %v483, 8
      %vm520 = vcmp.ge.s32.totalorder %v484, 8
      %vm521 = vcmp.ge.s32.totalorder %v485, 8
      %vm522 = vcmp.ge.s32.totalorder %v486, 8
      %vm523 = vcmp.ge.s32.totalorder %v487, 8
      %vm524 = vcmp.ge.s32.totalorder %v488, 8
      %vm525 = vcmp.ge.s32.totalorder %v489, 8
      %vm526 = vcmp.ge.s32.totalorder %v490, 8
      %vm527 = vcmp.ge.s32.totalorder %v491, 8
      %vm528 = vcmp.ge.s32.totalorder %v492, 8
      %vm529 = vcmp.ge.s32.totalorder %v493, 8
      %vm530 = vcmp.ge.s32.totalorder %v494, 8
      %vm531 = vcmp.ge.s32.totalorder %v495, 8
      %vm532 = vcmp.ge.s32.totalorder %v496, 8
      %vm533 = vcmp.ge.s32.totalorder %v497, 8
      %vm534 = vcmp.ge.s32.totalorder %v498, 8
      %vm535 = vcmp.ge.s32.totalorder %v502, 8
      %vm536 = vmor %vm519, %vm535
      %vm537 = vmor %vm520, %vm535
      %vm538 = vmor %vm521, %vm535
      %vm539 = vmor %vm522, %vm535
      %vm540 = vmor %vm523, %vm535
      %vm541 = vmor %vm524, %vm535
      %vm542 = vmor %vm525, %vm535
      %vm543 = vmor %vm526, %vm535
      %vm544 = vmor %vm527, %vm535
      %vm545 = vmor %vm528, %vm535
      %vm546 = vmor %vm529, %vm535
      %vm547 = vmor %vm530, %vm535
      %vm548 = vmor %vm531, %vm535
      %vm549 = vmor %vm532, %vm535
      %vm550 = vmor %vm533, %vm535
      %vm551 = vmor %vm534, %vm535
      %vm552 = vmor %vm503, %vm536
      %vm553 = vmor %vm504, %vm537
      %vm554 = vmor %vm505, %vm538
      %vm555 = vmor %vm506, %vm539
      %vm556 = vmor %vm507, %vm540
      %vm557 = vmor %vm508, %vm541
      %vm558 = vmor %vm509, %vm542
      %vm559 = vmor %vm510, %vm543
      %vm560 = vmor %vm511, %vm544
      %vm561 = vmor %vm512, %vm545
      %vm562 = vmor %vm513, %vm546
      %vm563 = vmor %vm514, %vm547
      %vm564 = vmor %vm515, %vm548
      %vm565 = vmor %vm516, %vm549
      %vm566 = vmor %vm517, %vm550
      %vm567 = vmor %vm518, %vm551
      %v568 = vld [vmem:[#allocation2] sm:$0x1]
      %v569 = vsel %vm552, %v417, 0.0
      %v570 = vsel %vm553, %v418, 0.0
      %v571 = vsel %vm554, %v419, 0.0
      %v572 = vsel %vm555, %v420, 0.0
      %v573 = vsel %vm556, %v421, 0.0
      %v574 = vsel %vm557, %v422, 0.0
      %v575 = vsel %vm558, %v423, 0.0
      %v576 = vsel %vm559, %v424, 0.0
      %v577 = vsel %vm560, %v425, 0.0
      %v578 = vsel %vm561, %v426, 0.0
      %v579 = vsel %vm562, %v427, 0.0
      %v580 = vsel %vm563, %v428, 0.0
      %v581 = vsel %vm564, %v429, 0.0
      %v582 = vsel %vm565, %v430, 0.0
      %v583 = vsel %vm566, %v431, 0.0
      %v584 = vsel %vm567, %v432, 0.0
      %v585 = vadd.f32 %v569, %v570
      %v586 = vadd.f32 %v585, %v571
      %v587 = vadd.f32 %v586, %v572
      %v588 = vadd.f32 %v587, %v573
      %v589 = vadd.f32 %v588, %v574
      %v590 = vadd.f32 %v589, %v575
      %v591 = vadd.f32 %v590, %v576
      %v592 = vadd.f32 %v591, %v577
      %v593 = vadd.f32 %v592, %v578
      %v594 = vadd.f32 %v593, %v579
      %v595 = vadd.f32 %v594, %v580
      %v596 = vadd.f32 %v595, %v581
      %v597 = vadd.f32 %v596, %v582
      %v598 = vadd.f32 %v597, %v583
      %v599 = vadd.f32 %v598, %v584
      %v600 = vrot.slane %v599, 4
      %v601 = vadd.f32 %v599, %v600
      %v602 = vrot.slane %v601, 2
      %v603 = vadd.f32 %v601, %v602
      %v604 = vrot.slane %v603, 1
      %v605 = vadd.f32 %v603, %v604
      %v606 = vsub.f32 %v568, %v605
      %607 = vst [vmem:[#allocation2] sm:$0x1] %v606
    $region25: #{tpu_custom_call.1} parent=1 // pred_fallthru
      _
    // Predicated region
    $region26: #{tpu_custom_call.1} parent=1 // pred_check
      _
    $region27: #{tpu_custom_call.1} parent=1 // pred_check_branch
      %609 = sbr.rel (0) target = $region29
    $region28: #{tpu_custom_call.1} parent=1 // pred_region
      %611 = vsyncadd [#allocation3], 0
      %s613 = sshll.u32 [#allocation2], 4
      %s614 = int_to_ptr.vmem [resolvable:$true] %s613
      %s615 = sshll.u32 %s4, 4
      %s616 = int_to_ptr.hbm [resolvable:$true] %s615
      %618 = dma.vmem_to_hbm [thread:$0]  %s614, 16, %s616, [#allocation3]
    $region29: #{tpu_custom_call.1} parent=1 // pred_fallthru
      _
    // Predicated region
    $region30: #{tpu_custom_call.1} parent=1 // pred_check
      _
    $region31: #{tpu_custom_call.1} parent=1 // pred_check_branch
      %620 = sbr.rel (0) target = $region33
    $region32: #{tpu_custom_call.1} parent=1 // pred_region
      %622 = dma.done [#allocation3], 16
    $region33: #{tpu_custom_call.1} parent=1 // pred_fallthru
      _
    %623 = vsyncpa [#allocation3], 1

</llo_original>
